<compile_context>
chip_gen: v6e
topology: v6e:2x2x1
jax: 0.10.0
libtpu: 0.0.40
codegen_flags: <defaults>
</compile_context>

<pallas_src>
import jax
import jax.numpy as jnp
from jax.experimental import pallas as pl
from jax.experimental.pallas import tpu as pltpu

BN_EPS = 1e-3  # scvi FCLayers uses BatchNorm1d(eps=0.001)
LANE = 128


def _round_up(x, m):
    return ((x + m - 1) // m) * m


def _vmem_capacity_bytes():
    """Best-effort per-core VMEM capacity; conservative (v7x-sized) fallback."""
    try:
        info = pltpu.get_tpu_info()
        cap = getattr(info, "vmem_capacity_bytes", None)
        if cap:
            return int(cap)
    except Exception:
        pass
    return 64 * 1024 * 1024


def _make_kernel(n_layers: int, n_output: int):
    def kernel(*refs):
        # refs: [x_bf16] + n_layers*[W_bf16, b_f32] + [W_out_bf16, b_out_f32] + [fD_out, p_out]
        x_ref = refs[0]
        idx = 1
        h_b = x_ref[...]          # bf16 activations feeding the MXU
        h_f32 = None
        for _ in range(n_layers):
            w_ref, b_ref = refs[idx], refs[idx + 1]
            idx += 2
            # Linear (+ folded BatchNorm) on the MXU: bf16 operands, f32 accumulation.
            acc = jnp.dot(h_b, w_ref[...], preferred_element_type=jnp.float32)
            # Bias (BN shift folded in) + ReLU in f32 on the VPU; Dropout is identity (eval).
            h_f32 = jnp.maximum(acc + b_ref[...], 0.0)
            # Carry bf16 between layers (single pack per layer).
            h_b = h_f32.astype(jnp.bfloat16)
        w_out_ref, b_out_ref = refs[idx], refs[idx + 1]
        fD_ref, p_ref = refs[idx + 2], refs[idx + 3]

        fD_ref[...] = h_f32.astype(fD_ref.dtype)

        # Head computed on a lane-dense padded slab (clean 128-wide MXU output),
        # but only the real n_output columns are stored to HBM.
        logits = jnp.dot(h_b, w_out_ref[...], preferred_element_type=jnp.float32) + b_out_ref[...]
        p = pl.reciprocal(1.0 + jnp.exp(-logits))  # exact sigmoid
        p_ref[...] = p[:, :n_output].astype(p_ref.dtype)

    return kernel


def _prepare_params(layer_params, w_out, b_out, out_pad):
    """Fold BN (general running stats) into each Linear host-side; cast weights to bf16."""
    prepped = []
    for (w, b, gamma, beta, mean, var) in layer_params:
        scale = gamma.astype(jnp.float32) * jax.lax.rsqrt(
            var.astype(jnp.float32) + jnp.float32(BN_EPS))
        w_eff = (w.astype(jnp.float32) * scale[None, :]).astype(jnp.bfloat16)
        b_eff = ((b.astype(jnp.float32) - mean.astype(jnp.float32)) * scale
                 + beta.astype(jnp.float32)).reshape(1, -1)
        prepped.append((w_eff, b_eff))
    n_hidden, n_out = w_out.shape
    w_out_p = jnp.zeros((n_hidden, out_pad), jnp.bfloat16)
    w_out_p = w_out_p.at[:, :n_out].set(w_out.astype(jnp.bfloat16))
    b_out_p = jnp.zeros((1, out_pad), jnp.float32)
    b_out_p = b_out_p.at[0, :n_out].set(b_out.astype(jnp.float32))
    return prepped, w_out_p, b_out_p


def discriminator_forward(x, layer_params, w_out, b_out, *, block_m=None):
    """x: [B, n_input]. layer_params: list of (W, b, gamma, beta, running_mean, running_var).
    Returns (f_D [B, n_hidden] f32, p_real [B, n_output] f32)."""
    B, n_input = x.shape
    n_layers = len(layer_params)
    assert n_layers >= 1
    n_hidden = layer_params[-1][0].shape[1]
    n_output = w_out.shape[1]
    out_pad = _round_up(max(n_output, LANE), LANE)  # lane-dense slab for the head matmul

    vmem_cap = _vmem_capacity_bytes()
    big_vmem = vmem_cap >= 96 * 1024 * 1024       # v5e/v6e (128 MiB) vs v7x (64 MiB)

    # Row tiling: multiples of 16 rows (bf16 sublane packing). For B > 16 guarantee >= 2
    # tiles so the "parallel" grid axis splits across both v7x TensorCores; cap tile size
    # at 1024 rows (2048 on 128-MiB-VMEM chips) to amortize per-step pipeline overhead.
    if block_m is None:
        cap = 2048 if big_vmem else 1024
        if B <= 16:
            block_m = 16
        else:
            block_m = min(cap, _round_up(pl.cdiv(B, 2), 16))
    block_m = max(16, _round_up(block_m, 16))
    B_pad = _round_up(B, block_m)
    grid = (B_pad // block_m,)

    # Feed x to the kernel in bf16 (it is cast to bf16 before the MXU anyway).
    x = x.astype(jnp.bfloat16)
    if B_pad != B:
        x = jnp.pad(x, ((0, B_pad - B), (0, 0)))

    prepped, w_out_p, b_out_p = _prepare_params(layer_params, w_out, b_out, out_pad)

    args = [x]
    in_specs = [pl.BlockSpec((block_m, n_input), lambda i: (i, 0))]
    for (w_eff, b_eff) in prepped:
        args += [w_eff, b_eff]
        # Grid-invariant blocks: constant index map => fetched once by the pipeline.
        in_specs += [
            pl.BlockSpec(w_eff.shape, lambda i: (0, 0)),
            pl.BlockSpec(b_eff.shape, lambda i: (0, 0)),
        ]
    args += [w_out_p, b_out_p]
    in_specs += [
        pl.BlockSpec(w_out_p.shape, lambda i: (0, 0)),
        pl.BlockSpec(b_out_p.shape, lambda i: (0, 0)),
    ]

    out_shape = (
        jax.ShapeDtypeStruct((B_pad, n_hidden), jnp.float32),
        jax.ShapeDtypeStruct((B_pad, n_output), jnp.float32),  # narrow p_real writeback
    )
    out_specs = (
        pl.BlockSpec((block_m, n_hidden), lambda i: (i, 0)),
        pl.BlockSpec((block_m, n_output), lambda i: (i, 0)),
    )

    # VMEM budget: double-buffered row tiles + (small) weight/bias blocks.
    vmem_need = 2 * block_m * n_input * 2            # x tiles (bf16)
    vmem_need += 2 * block_m * n_hidden * 4          # f_D tiles
    vmem_need += 2 * block_m * max(n_output, 1) * 4  # p tiles
    for (w_eff, b_eff) in prepped:
        vmem_need += 2 * (w_eff.size * 2 + b_eff.size * 4)
    vmem_need += 2 * (w_out_p.size * 2 + b_out_p.size * 4)
    # Generation-aware ceiling: leave ~16 MiB headroom for Mosaic internal scratch
    # (=> ~48 MiB on v7x, up to 112 MiB on v5e/v6e).
    vmem_ceiling = max(32 * 1024 * 1024, min(vmem_cap - 16 * 1024 * 1024, 112 * 1024 * 1024))
    vmem_limit = int(min(vmem_ceiling, max(16 * 1024 * 1024, 2 * vmem_need)))

    # Advisory cost estimate for the XLA scheduler.
    flops = 0
    d_in = n_input
    for _ in range(n_layers):
        flops += 2 * B_pad * d_in * n_hidden
        d_in = n_hidden
    flops += 2 * B_pad * n_hidden * out_pad
    bytes_accessed = (x.size * 2 + B_pad * n_hidden * 4 + B_pad * n_output * 4
                      + sum(w.size * 2 + b.size * 4 for (w, b) in prepped)
                      + w_out_p.size * 2 + b_out_p.size * 4)
    cost = pl.CostEstimate(flops=flops, transcendentals=B_pad * out_pad,
                           bytes_accessed=bytes_accessed)

    f = pl.pallas_call(
        _make_kernel(n_layers, n_output),
        out_shape=out_shape,
        grid_spec=pltpu.PrefetchScalarGridSpec(
            num_scalar_prefetch=0,
            grid=grid,
            in_specs=in_specs,
            out_specs=out_specs,
        ),
        compiler_params=pltpu.CompilerParams(
            dimension_semantics=("parallel",),
            vmem_limit_bytes=vmem_limit,
        ),
        cost_estimate=cost,
    )
    f_D_pad, p_out = f(*args)
    return f_D_pad[:B], p_out[:B]


def init_params(key, n_input, n_hidden, n_output, n_layers):
    """Deterministic synthetic parameters matching the PyTorch module's shapes.
    Each layer: (W, b, gamma, beta, running_mean, running_var)."""
    layer_params = []
    d_in = n_input
    for _ in range(n_layers):
        key, k1, k2 = jax.random.split(key, 3)
        bound = 1.0 / jnp.sqrt(d_in)
        w = jax.random.uniform(k1, (d_in, n_hidden), jnp.float32, -bound, bound)
        b = jax.random.uniform(k2, (n_hidden,), jnp.float32, -bound, bound)
        gamma = jnp.ones((n_hidden,), jnp.float32)
        beta = jnp.zeros((n_hidden,), jnp.float32)
        mean = jnp.zeros((n_hidden,), jnp.float32)
        var = jnp.ones((n_hidden,), jnp.float32)
        layer_params.append((w, b, gamma, beta, mean, var))
        d_in = n_hidden
    key, k1, k2 = jax.random.split(key, 3)
    bound = 1.0 / jnp.sqrt(n_hidden)
    w_out = jax.random.uniform(k1, (n_hidden, n_output), jnp.float32, -bound, bound)
    b_out = jax.random.uniform(k2, (n_output,), jnp.float32, -bound, bound)
    return layer_params, w_out, b_out


def reference_forward(x, layer_params, w_out, b_out):
    """Pure-JAX f32 reference (explicit BatchNorm with running stats, exact sigmoid)."""
    h = x
    for (w, b, gamma, beta, mean, var) in layer_params:
        h = h @ w + b
        h = (h - mean) / jnp.sqrt(var + BN_EPS) * gamma + beta
        h = jnp.maximum(h, 0.0)
    f_D = h
    p_real = jax.nn.sigmoid(h @ w_out + b_out)
    return f_D, p_real


def _run_case(key, B, n_input, n_hidden, n_output, n_layers):
    key, kx = jax.random.split(key)
    x = jax.random.normal(kx, (B, n_input), jnp.float32)
    layer_params, w_out, b_out = init_params(key, n_input, n_hidden, n_output, n_layers)

    f_D, p_real = discriminator_forward(x, layer_params, w_out, b_out)
    jax.block_until_ready((f_D, p_real))

    f_ref, p_ref = reference_forward(x, layer_params, w_out, b_out)
    assert f_D.shape == (B, n_hidden) and p_real.shape == (B, n_output)
    # bf16 MXU matmuls => looser tolerance.
    assert jnp.allclose(f_D, f_ref, atol=2e-2, rtol=2e-2)
    assert jnp.allclose(p_real, p_ref, atol=2e-2, rtol=2e-2)
    return key


if __name__ == "__main__":
    # Shapes consistent with the module defaults: Discriminator(n_input=32, n_hidden=128,
    # n_output=1, n_layers=1, n_cat_list=None).
    # TODO(synk): n_cat_list (one-hot categorical covariates) not exercised (None in this config).
    key = jax.random.PRNGKey(0)
    key = _run_case(key, B=8, n_input=32, n_hidden=128, n_output=1, n_layers=1)
    # Second small case exercising multi-tile grid, multi-layer bf16 carry and n_output > 1.
    key = _run_case(key, B=40, n_input=48, n_hidden=128, n_output=3, n_layers=2)
    print("KERNEL_OK")
</pallas_src>

<mosaic_0001>
module attributes {stable_mosaic.version = 11 : i64} {
  func.func @kernel(%arg0: i32, %arg1: memref<16x32xbf16, #tpu.memory_space<vmem>>, %arg2: memref<32x128xbf16, #tpu.memory_space<vmem>>, %arg3: memref<1x128xf32, #tpu.memory_space<vmem>>, %arg4: memref<128x128xbf16, #tpu.memory_space<vmem>>, %arg5: memref<1x128xf32, #tpu.memory_space<vmem>>, %arg6: memref<16x128xf32, #tpu.memory_space<vmem>>, %arg7: memref<16x1xf32, #tpu.memory_space<vmem>>) attributes {dimension_semantics = [#tpu.dimension_semantics<parallel>], iteration_bounds = array<i64: 1>, scalar_prefetch = 0 : i64, scratch_operands = 0 : i64, tpu.core_type = #tpu.core_type<tc>, window_params = [{transform_indices = @transform_0, window_bounds = array<i64: 16, 32>}, {pipeline_mode = #tpu.pipeline_mode<synchronous>, transform_indices = @transform_1, window_bounds = array<i64: 32, 128>}, {pipeline_mode = #tpu.pipeline_mode<synchronous>, transform_indices = @transform_2, window_bounds = array<i64: 1, 128>}, {pipeline_mode = #tpu.pipeline_mode<synchronous>, transform_indices = @transform_3, window_bounds = array<i64: 128, 128>}, {pipeline_mode = #tpu.pipeline_mode<synchronous>, transform_indices = @transform_4, window_bounds = array<i64: 1, 128>}, {transform_indices = @transform_5, window_bounds = array<i64: 16, 128>}, {transform_indices = @transform_6, window_bounds = array<i64: 16, 1>}]} {
    %c0 = arith.constant 0 : index
    %c0_0 = arith.constant 0 : index
    %0 = vector.load %arg1[%c0, %c0_0] : memref<16x32xbf16, #tpu.memory_space<vmem>>, vector<16x32xbf16>
    %c0_1 = arith.constant 0 : index
    %c0_2 = arith.constant 0 : index
    %1 = vector.load %arg2[%c0_1, %c0_2] : memref<32x128xbf16, #tpu.memory_space<vmem>>, vector<32x128xbf16>
    %cst = arith.constant dense<0.000000e+00> : vector<16x128xf32>
    %2 = tpu.matmul %0, %1, %cst {dimension_numbers = #tpu.dot_dimension_numbers<[1], [0], [0], [1], [0, 0, 1, 1], [], []>} : vector<16x32xbf16>, vector<32x128xbf16>, vector<16x128xf32> -> vector<16x128xf32>
    %c0_3 = arith.constant 0 : index
    %c0_4 = arith.constant 0 : index
    %3 = vector.load %arg3[%c0_3, %c0_4] : memref<1x128xf32, #tpu.memory_space<vmem>>, vector<1x128xf32>
    %4 = vector.broadcast %3 : vector<1x128xf32> to vector<16x128xf32>
    %5 = arith.addf %2, %4 : vector<16x128xf32>
    %cst_5 = arith.constant 0.000000e+00 : f32
    %6 = vector.broadcast %cst_5 : f32 to vector<16x128xf32>
    %7 = arith.maximumf %5, %6 : vector<16x128xf32>
    %8 = arith.truncf %7 : vector<16x128xf32> to vector<16x128xbf16>
    %c0_6 = arith.constant 0 : index
    %c0_7 = arith.constant 0 : index
    %9 = vector.load %arg6[%c0_6, %c0_7] : memref<16x128xf32, #tpu.memory_space<vmem>>, vector<16x128xf32>
    tpu.vector_store %arg6[%c0_6, %c0_7], %7 {strides = array<i32>} : memref<16x128xf32, #tpu.memory_space<vmem>>, vector<16x128xf32>,
    %c0_8 = arith.constant 0 : index
    %c0_9 = arith.constant 0 : index
    %10 = vector.load %arg4[%c0_8, %c0_9] : memref<128x128xbf16, #tpu.memory_space<vmem>>, vector<128x128xbf16>
    %cst_10 = arith.constant dense<0.000000e+00> : vector<16x128xf32>
    %11 = tpu.matmul %8, %10, %cst_10 {dimension_numbers = #tpu.dot_dimension_numbers<[1], [0], [0], [1], [0, 0, 1, 1], [], []>} : vector<16x128xbf16>, vector<128x128xbf16>, vector<16x128xf32> -> vector<16x128xf32>
    %c0_11 = arith.constant 0 : index
    %c0_12 = arith.constant 0 : index
    %12 = vector.load %arg5[%c0_11, %c0_12] : memref<1x128xf32, #tpu.memory_space<vmem>>, vector<1x128xf32>
    %13 = vector.broadcast %12 : vector<1x128xf32> to vector<16x128xf32>
    %14 = arith.addf %11, %13 : vector<16x128xf32>
    %cst_13 = arith.constant 0.000000e+00 : f32
    %15 = vector.broadcast %cst_13 : f32 to vector<16x128xf32>
    %16 = arith.subf %15, %14 : vector<16x128xf32>
    %17 = math.exp %16 : vector<16x128xf32>
    %cst_14 = arith.constant 1.000000e+00 : f32
    %18 = vector.broadcast %cst_14 : f32 to vector<16x128xf32>
    %19 = arith.addf %18, %17 : vector<16x128xf32>
    %20 = tpu.reciprocal %19 : vector<16x128xf32> -> vector<16x128xf32>
    %21 = vector.extract_strided_slice %20 {offsets = [0, 0], sizes = [16, 1], strides = [1, 1]} : vector<16x128xf32> to vector<16x1xf32>
    %c0_15 = arith.constant 0 : index
    %c0_16 = arith.constant 0 : index
    %22 = vector.load %arg7[%c0_15, %c0_16] : memref<16x1xf32, #tpu.memory_space<vmem>>, vector<16x1xf32>
    tpu.vector_store %arg7[%c0_15, %c0_16], %21 {strides = array<i32>} : memref<16x1xf32, #tpu.memory_space<vmem>>, vector<16x1xf32>,
    return
  }
  func.func @transform_0(%arg0: i32) -> (i32, i32) {
    %c0_i32 = arith.constant 0 : i32
    %c0_i32_0 = arith.constant 0 : i32
    return %arg0, %c0_i32 : i32, i32
  }
  func.func @transform_1(%arg0: i32) -> (i32, i32) {
    %c0_i32 = arith.constant 0 : i32
    %c0_i32_0 = arith.constant 0 : i32
    %c0_i32_1 = arith.constant 0 : i32
    return %c0_i32, %c0_i32_0 : i32, i32
  }
  func.func @transform_2(%arg0: i32) -> (i32, i32) {
    %c0_i32 = arith.constant 0 : i32
    %c0_i32_0 = arith.constant 0 : i32
    %c0_i32_1 = arith.constant 0 : i32
    return %c0_i32, %c0_i32_0 : i32, i32
  }
  func.func @transform_3(%arg0: i32) -> (i32, i32) {
    %c0_i32 = arith.constant 0 : i32
    %c0_i32_0 = arith.constant 0 : i32
    %c0_i32_1 = arith.constant 0 : i32
    return %c0_i32, %c0_i32_0 : i32, i32
  }
  func.func @transform_4(%arg0: i32) -> (i32, i32) {
    %c0_i32 = arith.constant 0 : i32
    %c0_i32_0 = arith.constant 0 : i32
    %c0_i32_1 = arith.constant 0 : i32
    return %c0_i32, %c0_i32_0 : i32, i32
  }
  func.func @transform_5(%arg0: i32) -> (i32, i32) {
    %c0_i32 = arith.constant 0 : i32
    %c0_i32_0 = arith.constant 0 : i32
    return %arg0, %c0_i32 : i32, i32
  }
  func.func @transform_6(%arg0: i32) -> (i32, i32) {
    %c0_i32 = arith.constant 0 : i32
    %c0_i32_0 = arith.constant 0 : i32
    return %arg0, %c0_i32 : i32, i32
  }
}

</mosaic_0001>

<llo_original>
// kernel: tpu_custom_call.1
$region0: #{tpu_custom_call.1}
  #allocation0 [shape = 'u32[]', space=smem, size = 0x4, offset = 0x4, fixed_abs, tag = 'smem constant byte address 0x4 - core index']
  #allocation1 [shape = 'u32[144,128]{1,0:T(1,128)}', space=vmem, size = 0x12000, scoped, tag = 'internal scratch']
  %s0 = inlined_call_operand.hbm [shape: bf16[16,32], index: 0, kind: input, shape index: {}]
  %s1 = inlined_call_operand.hbm [shape: bf16[32,128], index: 1, kind: input, shape index: {}]
  %s2 = inlined_call_operand.vmem [shape: f32[1,128], index: 2, kind: input, shape index: {}]
  %s3 = inlined_call_operand.hbm [shape: bf16[128,128], index: 3, kind: input, shape index: {}]
  %s4 = inlined_call_operand.vmem [shape: f32[1,128], index: 4, kind: input, shape index: {}]
  %s5 = inlined_call_operand.hbm [shape: f32[16,128], index: 5, kind: output, shape index: {0}]
  %s6 = inlined_call_operand.vmem [shape: f32[16,1], index: 6, kind: output, shape index: {1}]
  %7 = xla_tuple %s5, %s6
  %s8 = sld [smem:[#allocation0]]
  $region50: #{tpu_custom_call.1} parent=0
    _
  %s10 = ssub.s32 1, %s8
  %s11 = scalar_select 0, %s10, %s8
  $region1: #{tpu_custom_call.1} parent=0
    #allocation2 [shape = 'u8[4096]{0}', space=vmem, size = 0x1000, scoped, tag = 'input window, operand 0, single buffered']
    #allocation3 [shape = 's32[1]{0}', space=sflag, size = 0x4, scoped, tag = 'scoped memory for tpu_custom_call.1']
    #allocation4 [shape = 's32[1]{0}', space=sflag, size = 0x4, scoped, tag = 'scoped memory for tpu_custom_call.1']
    #allocation5 [shape = 'u8[8192]{0}', space=vmem, size = 0x2000, scoped, tag = 'input window, operand 1, single buffered']
    #allocation6 [shape = 's32[1]{0}', space=sflag, size = 0x4, scoped, tag = 'scoped memory for tpu_custom_call.1']
    #allocation7 [shape = 'u8[32768]{0}', space=vmem, size = 0x8000, scoped, tag = 'input window, operand 3, single buffered']
    #allocation8 [shape = 'u8[8192]{0}', space=vmem, size = 0x2000, scoped, tag = 'output window, operand 0, single buffered']
    %12 = vsyncpa [#allocation3], 0
    %13 = vsyncpa [#allocation6], 0
    %14 = vsyncpa [#allocation4], 0
    // Predicated region
    $region2: #{tpu_custom_call.1} parent=1 // pred_check
      _
    $region3: #{tpu_custom_call.1} parent=1 // pred_check_branch
      %16 = sbr.rel (0) target = $region5
    $region4: #{tpu_custom_call.1} parent=1 // pred_region
      %s18 = ssub.s32 128, 128
      %19 = vsyncadd [#allocation3], %s18
      %s20 = sshll.u32 [#allocation2], 4
      %s21 = int_to_ptr.vmem [resolvable:$true] %s20
      %26 = dma.hbm_to_vmem [thread:$0]  %s0, 128, %s21, [#allocation3], 64, 64, 4
    $region5: #{tpu_custom_call.1} parent=1 // pred_fallthru
      _
    // Predicated region
    $region6: #{tpu_custom_call.1} parent=1 // pred_check
      _
    $region7: #{tpu_custom_call.1} parent=1 // pred_check_branch
      %28 = sbr.rel (0) target = $region9
    $region8: #{tpu_custom_call.1} parent=1 // pred_region
      %s30 = ssub.s32 256, 256
      %31 = vsyncadd [#allocation6], %s30
      %s32 = sshll.u32 [#allocation5], 4
      %s33 = int_to_ptr.vmem [resolvable:$true] %s32
      %38 = dma.hbm_to_vmem [thread:$0]  %s1, 256, %s33, [#allocation6], 64, 64, 4
    $region9: #{tpu_custom_call.1} parent=1 // pred_fallthru
      _
    // Predicated region
    $region10: #{tpu_custom_call.1} parent=1 // pred_check
      _
    $region11: #{tpu_custom_call.1} parent=1 // pred_check_branch
      %40 = sbr.rel (0) target = $region13
    $region12: #{tpu_custom_call.1} parent=1 // pred_region
      _
    $region13: #{tpu_custom_call.1} parent=1 // pred_fallthru
      _
    // Predicated region
    $region14: #{tpu_custom_call.1} parent=1 // pred_check
      _
    $region15: #{tpu_custom_call.1} parent=1 // pred_check_branch
      %42 = sbr.rel (0) target = $region17
    $region16: #{tpu_custom_call.1} parent=1 // pred_region
      %s44 = ssub.s32 1024, 1024
      %45 = vsyncadd [#allocation6], %s44
      %s46 = sshll.u32 [#allocation7], 4
      %s47 = int_to_ptr.vmem [resolvable:$true] %s46
      %52 = dma.hbm_to_vmem [thread:$0]  %s3, 1024, %s47, [#allocation6], 64, 64, 4
    $region17: #{tpu_custom_call.1} parent=1 // pred_fallthru
      _
    // Predicated region
    $region18: #{tpu_custom_call.1} parent=1 // pred_check
      _
    $region19: #{tpu_custom_call.1} parent=1 // pred_check_branch
      %54 = sbr.rel (0) target = $region21
    $region20: #{tpu_custom_call.1} parent=1 // pred_region
      _
    $region21: #{tpu_custom_call.1} parent=1 // pred_fallthru
      _
    // Predicated region
    $region22: #{tpu_custom_call.1} parent=1 // pred_check
      _
    $region23: #{tpu_custom_call.1} parent=1 // pred_check_branch
      %56 = sbr.rel (0) target = $region25
    $region24: #{tpu_custom_call.1} parent=1 // pred_region
      %57 = dma.done [#allocation3], 128
    $region25: #{tpu_custom_call.1} parent=1 // pred_fallthru
      _
    // Predicated region
    $region26: #{tpu_custom_call.1} parent=1 // pred_check
      _
    $region27: #{tpu_custom_call.1} parent=1 // pred_check_branch
      %59 = sbr.rel (0) target = $region29
    $region28: #{tpu_custom_call.1} parent=1 // pred_region
      %60 = dma.done [#allocation6], 256
    $region29: #{tpu_custom_call.1} parent=1 // pred_fallthru
      _
    // Predicated region
    $region30: #{tpu_custom_call.1} parent=1 // pred_check
      _
    $region31: #{tpu_custom_call.1} parent=1 // pred_check_branch
      %62 = sbr.rel (0) target = $region33
    $region32: #{tpu_custom_call.1} parent=1 // pred_region
      %63 = dma.done [#allocation6], 1024
    $region33: #{tpu_custom_call.1} parent=1 // pred_fallthru
      _
    %v65 = vld [vmem:[#allocation2] sm:$0xf]
    %v66 = vld [vmem:[#allocation2 + $0x4] sm:$0xf]
    %v67 = vld [vmem:[#allocation5] sm:$0xf]
    %v68 = vld [vmem:[#allocation5 + $0x4] sm:$0xf]
    %v69 = vld [vmem:[#allocation5 + $0x8] sm:$0xf]
    %v70 = vld [vmem:[#allocation5 + $0xc] sm:$0xf]
    %v71 = vld [vmem:[%s2] sm:$0x1]
    %v73 = vlaneseq
    %v74 = vshrl.u32 %v73, 7
    %v75 = vsub.s32 0, %v74
    %v76 = vrot.slane %v71, %v75
    %v80 = vunpack.c.l.b16 %v65
    %v81 = vunpack.c.l.b16 %v66
    %v82 = vpack.c.b16 %v81, %v80
    %v87 = vunpack.c.l.b16 %v67
    %v88 = vunpack.c.l.b16 %v68
    %v89 = vunpack.c.l.b16 %v69
    %v90 = vunpack.c.l.b16 %v70
    %v91 = vpack.c.b16 %v88, %v87
    %v92 = vpack.c.b16 %v90, %v89
    %vm95 = vcmask 261120
    %v97 = vsel %vm95, %v82, 0
    %99 = vmatprep.subr.bf16.mxu0 0
    %100 = vmatpush1.bf16.msra.mxu0 0
    %101 = vmatprep.subr.bf16.mxu0 0
    %102 = vmatpush1.bf16.msra.mxu0 0
    %103 = vmatprep.subr.bf16.mxu0 0
    %104 = vmatpush1.bf16.msra.mxu0 0
    %105 = vmatprep.subr.bf16.mxu0 0
    %106 = vmatpush1.bf16.msra.mxu0 0
    %107 = vmatprep.subr.bf16.mxu0 0
    %108 = vmatpush1.bf16.msra.mxu0 0
    %109 = vmatprep.subr.bf16.mxu0 0
    %110 = vmatpush1.bf16.msra.mxu0 0
    %111 = vmatprep.subr.bf16.mxu0 0
    %112 = vmatpush1.bf16.msra.mxu0 %v92
    %113 = vmatprep.subr.bf16.mxu0 0
    %114 = vmatpush1.bf16.msra.mxu0 %v91
    %115 = vmatprep.subr.bf16.mxu0 0
    %116 = vmatpush2.bf16.msra.mxu0 0
    %117 = vmatprep.subr.bf16.mxu0 0
    %118 = vmatpush2.bf16.msra.mxu0 0
    %119 = vmatprep.subr.bf16.mxu0 0
    %120 = vmatpush2.bf16.msra.mxu0 0
    %121 = vmatprep.subr.bf16.mxu0 0
    %122 = vmatpush2.bf16.msra.mxu0 0
    %123 = vmatprep.subr.bf16.mxu0 0
    %124 = vmatpush2.bf16.msra.mxu0 0
    %125 = vmatprep.subr.bf16.mxu0 0
    %126 = vmatpush2.bf16.msra.mxu0 0
    %127 = vmatprep.subr.bf16.mxu0 0
    %128 = vmatpush2.bf16.msra.mxu0 0
    %129 = vmatprep.subr.bf16.mxu0 0
    %130 = vmatpush2.bf16.msra.mxu0 0
    %131 = vmatprep.mubr.bf16.mxu0 0
    %132 = vmatmul.mubr.bf16.gmra.mxu0 %v97
    %v133 = vpop.f32.mrf.mxu0
    %v134 = vadd.f32 %v76, %v133
    %v135 = vpop.f32.mrf.mxu0
    %v136 = vpop.f32.mrf.mxu0
    %v137 = vadd.f32 %v76, %v136
    %v138 = vpop.f32.mrf.mxu0
    %139 = vdwg.mxu0
    %v140 = vmax.f32 %v134, 0.0
    %v141 = vmax.f32 %v137, 0.0
    %v142 = vpack.c.bf16 %v141, %v140
    %143 = vst [vmem:[#allocation8] sm:$0xff] %v140
    %144 = vst [vmem:[#allocation8 + $0x8] sm:$0xff] %v141
    %v145 = vld [vmem:[#allocation7] sm:$0xf]
    %v146 = vld [vmem:[#allocation7 + $0x4] sm:$0xf]
    %v147 = vld [vmem:[#allocation7 + $0x8] sm:$0xf]
    %v148 = vld [vmem:[#allocation7 + $0xc] sm:$0xf]
    %v149 = vld [vmem:[#allocation7 + $0x10] sm:$0xf]
    %v150 = vld [vmem:[#allocation7 + $0x14] sm:$0xf]
    %v151 = vld [vmem:[#allocation7 + $0x18] sm:$0xf]
    %v152 = vld [vmem:[#allocation7 + $0x1c] sm:$0xf]
    %v153 = vld [vmem:[#allocation7 + $0x20] sm:$0xf]
    %v154 = vld [vmem:[#allocation7 + $0x24] sm:$0xf]
    %v155 = vld [vmem:[#allocation7 + $0x28] sm:$0xf]
    %v156 = vld [vmem:[#allocation7 + $0x2c] sm:$0xf]
    %v157 = vld [vmem:[#allocation7 + $0x30] sm:$0xf]
    %v158 = vld [vmem:[#allocation7 + $0x34] sm:$0xf]
    %v159 = vld [vmem:[#allocation7 + $0x38] sm:$0xf]
    %v160 = vld [vmem:[#allocation7 + $0x3c] sm:$0xf]
    %v161 = vld [vmem:[%s4] sm:$0x1]
    %v163 = vlaneseq
    %v164 = vshrl.u32 %v163, 7
    %v165 = vsub.s32 0, %v164
    %v166 = vrot.slane %v161, %v165
    %v184 = vunpack.c.l.b16 %v145
    %v185 = vunpack.c.l.b16 %v146
    %v186 = vunpack.c.l.b16 %v147
    %v187 = vunpack.c.l.b16 %v148
    %v188 = vunpack.c.l.b16 %v149
    %v189 = vunpack.c.l.b16 %v150
    %v190 = vunpack.c.l.b16 %v151
    %v191 = vunpack.c.l.b16 %v152
    %v192 = vunpack.c.l.b16 %v153
    %v193 = vunpack.c.l.b16 %v154
    %v194 = vunpack.c.l.b16 %v155
    %v195 = vunpack.c.l.b16 %v156
    %v196 = vunpack.c.l.b16 %v157
    %v197 = vunpack.c.l.b16 %v158
    %v198 = vunpack.c.l.b16 %v159
    %v199 = vunpack.c.l.b16 %v160
    %v200 = vpack.c.b16 %v185, %v184
    %v201 = vpack.c.b16 %v187, %v186
    %v202 = vpack.c.b16 %v189, %v188
    %v203 = vpack.c.b16 %v191, %v190
    %v204 = vpack.c.b16 %v193, %v192
    %v205 = vpack.c.b16 %v195, %v194
    %v206 = vpack.c.b16 %v197, %v196
    %v207 = vpack.c.b16 %v199, %v198
    %216 = vmatprep.subr.bf16.mxu0 0
    %217 = vmatpush1.bf16.msra.mxu0 %v207
    %218 = vmatprep.subr.bf16.mxu0 0
    %219 = vmatpush1.bf16.msra.mxu0 %v206
    %220 = vmatprep.subr.bf16.mxu0 0
    %221 = vmatpush1.bf16.msra.mxu0 %v205
    %222 = vmatprep.subr.bf16.mxu0 0
    %223 = vmatpush1.bf16.msra.mxu0 %v204
    %224 = vmatprep.subr.bf16.mxu0 0
    %225 = vmatpush1.bf16.msra.mxu0 %v203
    %226 = vmatprep.subr.bf16.mxu0 0
    %227 = vmatpush1.bf16.msra.mxu0 %v202
    %228 = vmatprep.subr.bf16.mxu0 0
    %229 = vmatpush1.bf16.msra.mxu0 %v201
    %230 = vmatprep.subr.bf16.mxu0 0
    %231 = vmatpush1.bf16.msra.mxu0 %v200
    %232 = vmatprep.subr.bf16.mxu0 0
    %233 = vmatpush2.bf16.msra.mxu0 0
    %234 = vmatprep.subr.bf16.mxu0 0
    %235 = vmatpush2.bf16.msra.mxu0 0
    %236 = vmatprep.subr.bf16.mxu0 0
    %237 = vmatpush2.bf16.msra.mxu0 0
    %238 = vmatprep.subr.bf16.mxu0 0
    %239 = vmatpush2.bf16.msra.mxu0 0
    %240 = vmatprep.subr.bf16.mxu0 0
    %241 = vmatpush2.bf16.msra.mxu0 0
    %242 = vmatprep.subr.bf16.mxu0 0
    %243 = vmatpush2.bf16.msra.mxu0 0
    %244 = vmatprep.subr.bf16.mxu0 0
    %245 = vmatpush2.bf16.msra.mxu0 0
    %246 = vmatprep.subr.bf16.mxu0 0
    %247 = vmatpush2.bf16.msra.mxu0 0
    %248 = vmatprep.mubr.bf16.mxu0 0
    %249 = vmatmul.mubr.bf16.gmra.mxu0 %v142
    %v250 = vpop.f32.mrf.mxu0
    %v251 = vadd.f32 %v166, %v250
    %v252 = vpop.f32.mrf.mxu0
    %v253 = vpop.f32.mrf.mxu0
    %v254 = vadd.f32 %v166, %v253
    %v255 = vpop.f32.mrf.mxu0
    %256 = vdwg.mxu0
    %v257 = vsub.f32 0.0, %v251
    %v258 = vsub.f32 0.0, %v254
    %v259 = vmul.f32 %v257, 1.442695
    %v260 = vpow.pop %v259
    %v261 = vmul.f32 %v258, 1.442695
    %v262 = vpow.pop %v261
    %v263 = vadd.f32 %v260, 1.0
    %v264 = vadd.f32 %v262, 1.0
    %v265 = vrcp.pop %v263
    %v266 = vrcp.pop %v264
    %vm267 = vcmask 7168
    %268 = vst.msk [vmem:[%s6] sm:$0xff] %vm267, %v265
    %269 = vst.msk [vmem:[%s6 + $0x8] sm:$0xff] %vm267, %v266
    // Predicated region
    $region34: #{tpu_custom_call.1} parent=1 // pred_check
      _
    $region35: #{tpu_custom_call.1} parent=1 // pred_check_branch
      %271 = sbr.rel (0) target = $region37
    $region36: #{tpu_custom_call.1} parent=1 // pred_region
      %s273 = ssub.s32 256, 256
      %274 = vsyncadd [#allocation4], %s273
      %s275 = sshll.u32 [#allocation8], 4
      %s276 = int_to_ptr.vmem [resolvable:$true] %s275
      %281 = dma.vmem_to_hbm [thread:$0]  %s276, 256, %s5, [#allocation4], 128, 128, 8
    $region37: #{tpu_custom_call.1} parent=1 // pred_fallthru
      _
    // Predicated region
    $region38: #{tpu_custom_call.1} parent=1 // pred_check
      _
    $region39: #{tpu_custom_call.1} parent=1 // pred_check_branch
      %283 = sbr.rel (0) target = $region41
    $region40: #{tpu_custom_call.1} parent=1 // pred_region
      _
    $region41: #{tpu_custom_call.1} parent=1 // pred_fallthru
      _
    // Predicated region
    $region42: #{tpu_custom_call.1} parent=1 // pred_check
      _
    $region43: #{tpu_custom_call.1} parent=1 // pred_check_branch
      %285 = sbr.rel (0) target = $region45
    $region44: #{tpu_custom_call.1} parent=1 // pred_region
      %286 = dma.done [#allocation4], 256
    $region45: #{tpu_custom_call.1} parent=1 // pred_fallthru
      _
    // Predicated region
    $region46: #{tpu_custom_call.1} parent=1 // pred_check
      _
    $region47: #{tpu_custom_call.1} parent=1 // pred_check_branch
      %288 = sbr.rel (0) target = $region49
    $region48: #{tpu_custom_call.1} parent=1 // pred_region
      _
    $region49: #{tpu_custom_call.1} parent=1 // pred_fallthru
      _
    %289 = vsyncpa [#allocation3], 1
    %290 = vsyncpa [#allocation6], 1
    %291 = vsyncpa [#allocation4], 1

</llo_original>
